<compile_context>
chip_gen: v7x
topology: tpu7x:2x2x1
jax: 0.10.0
libtpu: 0.0.40
codegen_flags: <defaults>
</compile_context>

<pallas_src>
import jax
import jax.numpy as jnp
from jax.experimental import pallas as pl
from jax.experimental.pallas import tpu as pltpu

HIDDEN = 32            # base MLP width (square Linear layers)
NUM_LAYERS = 3         # base_model: Linear -> tanh -> Linear -> tanh -> Linear
LORA_HIDDEN = 32       # lora_model: Linear(1, 32) -> tanh -> Linear(32, TOTAL_DIM)
CHUNK = 2 * HIDDEN + 1             # per-layer lora params: A (in), B (out), alpha
TOTAL_DIM = NUM_LAYERS * CHUNK     # 195
BATCH = 8


def combined_kernel(re_ref, x_ref, vec_ref, lw2_ref, lb2_ref, w_ref, out_ref):
    """Fused hypernetwork + LoRA-adjusted 3-layer MLP forward.

    re_ref  : (1,1)   f32, SMEM   -- Reynolds number scalar
    x_ref   : (N,32)  f32, VMEM   -- batch input
    vec_ref : (8,32)  f32, VMEM   -- rows: [lw1, lb1, b0, b1, b2, 0, 0, 0]
    lw2_ref : (32,195) f32, VMEM  -- lora head weight, (in,out) layout
    lb2_ref : (1,195) f32, VMEM   -- lora head bias
    w_ref   : (3,32,32) f32, VMEM -- base weights stacked, (in,out) layout
    out_ref : (N,32)  f32, VMEM
    """
    re = re_ref[0, 0]                                  # scalar from SMEM

    # ---- lora hypernetwork -------------------------------------------------
    # First lora Linear has in_features == 1 -> broadcast multiply.
    lw1 = vec_ref[0:1, :]                              # (1, 32)
    lb1 = vec_ref[1:2, :]                              # (1, 32)
    h = jnp.tanh(re * lw1 + lb1)                       # (1, 32)

    # One fused MXU pass for all per-layer (A, B, alpha) chunks.
    lora = (jnp.dot(h, lw2_ref[...], preferred_element_type=jnp.float32)
            + lb2_ref[...])                            # (1, 195)

    # ---- base MLP forward with per-layer rank-1 weight adjustment ----------
    # Torch adds alpha * (A @ B) [shape (in,out)] onto weight [shape (out,in)];
    # with in == out that means W_t[o, i] += alpha * A[o] * B[i].  In (in,out)
    # layout:  W[i, o] += alpha * A[o] * B[i], so
    #     y = h @ W + b + alpha * (h . B) * A
    act = x_ref[...]
    for l in range(NUM_LAYERS):
        off = l * CHUNK
        A = lora[:, off:off + HIDDEN]                          # (1, 32)
        B = lora[:, off + HIDDEN:off + 2 * HIDDEN]             # (1, 32)
        alpha = lora[:, off + 2 * HIDDEN:off + 2 * HIDDEN + 1]  # (1, 1)
        b = vec_ref[2 + l:3 + l, :]                            # (1, 32)

        base = jnp.dot(act, w_ref[l], preferred_element_type=jnp.float32)
        s = jnp.sum(act * B, axis=1, keepdims=True)            # (N, 1)
        act = base + b + alpha * s * A
        if l < NUM_LAYERS - 1:
            act = jnp.tanh(act)

    out_ref[...] = act


def combined_forward(x, Re, params):
    """Wrapper: packs torch-layout params into the kernel's slab layout (glue)."""
    re = jnp.full((1, 1), Re, dtype=jnp.float32)

    # (8, 32) row-vector slab: [lw1, lb1, b0, b1, b2, zero pad rows]
    lw1_row = params["lw1_t"].reshape(1, LORA_HIDDEN)            # (32,1) -> (1,32)
    lb1_row = params["lb1"].reshape(1, LORA_HIDDEN)
    b_rows = [params["b"][l].reshape(1, HIDDEN) for l in range(NUM_LAYERS)]
    pad = jnp.zeros((8 - (2 + NUM_LAYERS), HIDDEN), jnp.float32)
    vec_slab = jnp.concatenate([lw1_row, lb1_row] + b_rows + [pad], axis=0)

    lw2_slab = params["lw2_t"].T                                 # (32, 195)
    lb2_slab = params["lb2"].reshape(1, TOTAL_DIM)               # (1, 195)
    w_slab = jnp.stack([params["W_t"][l].T for l in range(NUM_LAYERS)],
                       axis=0)                                   # (3, 32, 32) (in,out)

    vmem = pltpu.MemorySpace.VMEM
    smem = pltpu.MemorySpace.SMEM
    return pl.pallas_call(
        combined_kernel,
        out_shape=jax.ShapeDtypeStruct((x.shape[0], HIDDEN), jnp.float32),
        in_specs=[
            pl.BlockSpec(memory_space=smem),   # Re scalar
            pl.BlockSpec(memory_space=vmem),   # x
            pl.BlockSpec(memory_space=vmem),   # row-vector slab
            pl.BlockSpec(memory_space=vmem),   # lw2 slab
            pl.BlockSpec(memory_space=vmem),   # lb2 slab
            pl.BlockSpec(memory_space=vmem),   # base weight slab
        ],
        out_specs=pl.BlockSpec(memory_space=vmem),
    )(re, x, vec_slab, lw2_slab, lb2_slab, w_slab)


def reference_forward(x, Re, params):
    """Pure-JAX literal transcription of the PyTorch forward (torch layouts)."""
    lora_in = jnp.full((1, 1), Re, dtype=jnp.float32)
    h = jnp.tanh(lora_in @ params["lw1_t"].T + params["lb1"][None, :])
    lora = (h @ params["lw2_t"].T + params["lb2"][None, :])[0]        # (TOTAL_DIM,)
    cur = 0
    act = x
    for l in range(NUM_LAYERS):
        in_dim = out_dim = HIDDEN
        A = lora[cur:cur + in_dim].reshape(in_dim, 1); cur += in_dim
        B = lora[cur:cur + out_dim].reshape(1, out_dim); cur += out_dim
        alpha = lora[cur]; cur += 1
        W_new = params["W_t"][l] + alpha * (A @ B)                    # (out, in)
        act = act @ W_new.T + params["b"][l][None, :]
        if l < NUM_LAYERS - 1:
            act = jnp.tanh(act)
    return act


def init_params(key):
    """Deterministic synthetic parameters in PyTorch (out, in) layout."""
    ks = jax.random.split(key, 10)
    params = {
        "lw1_t": 0.05 * jax.random.normal(ks[0], (LORA_HIDDEN, 1), jnp.float32),
        "lb1": 0.05 * jax.random.normal(ks[1], (LORA_HIDDEN,), jnp.float32),
        "lw2_t": (jax.random.normal(ks[2], (TOTAL_DIM, LORA_HIDDEN), jnp.float32)
                  / jnp.sqrt(LORA_HIDDEN) * 0.5),
        "lb2": 0.05 * jax.random.normal(ks[3], (TOTAL_DIM,), jnp.float32),
        "W_t": [jax.random.normal(ks[4 + l], (HIDDEN, HIDDEN), jnp.float32)
                / jnp.sqrt(HIDDEN) for l in range(NUM_LAYERS)],
        "b": [0.05 * jax.random.normal(ks[7 + l], (HIDDEN,), jnp.float32)
              for l in range(NUM_LAYERS)],
    }
    return params


if __name__ == "__main__":
    key = jax.random.PRNGKey(0)
    pkey, xkey = jax.random.split(key)
    params = init_params(pkey)
    x = jax.random.normal(xkey, (BATCH, HIDDEN), jnp.float32)
    Re = 40.0   # Kovasznay-flow Reynolds number

    out = combined_forward(x, Re, params)
    out = jax.block_until_ready(out)

    ref = jax.block_until_ready(reference_forward(x, Re, params))
    max_err = float(jnp.max(jnp.abs(out - ref)))
    assert out.shape == (BATCH, HIDDEN), out.shape
    assert max_err < 2e-3, f"mismatch vs reference: {max_err}"
    print("KERNEL_OK")
</pallas_src>

<mosaic_0001>
module attributes {stable_mosaic.version = 11 : i64} {
  func.func @combined_kernel(%arg0: memref<1x1xf32, #tpu.memory_space<smem>>, %arg1: memref<8x32xf32, #tpu.memory_space<vmem>>, %arg2: memref<8x32xf32, #tpu.memory_space<vmem>>, %arg3: memref<32x195xf32, #tpu.memory_space<vmem>>, %arg4: memref<1x195xf32, #tpu.memory_space<vmem>>, %arg5: memref<3x32x32xf32, #tpu.memory_space<vmem>>, %arg6: memref<8x32xf32, #tpu.memory_space<vmem>>) attributes {dimension_semantics = [], scalar_prefetch = 0 : i64, scratch_operands = 0 : i64, tpu.core_type = #tpu.core_type<tc>} {
    %c0 = arith.constant 0 : index
    %c0_0 = arith.constant 0 : index
    %0 = memref.load %arg0[%c0, %c0_0] : memref<1x1xf32, #tpu.memory_space<smem>>
    %c0_1 = arith.constant 0 : index
    %c0_2 = arith.constant 0 : index
    %1 = vector.load %arg2[%c0_1, %c0_2] : memref<8x32xf32, #tpu.memory_space<vmem>>, vector<1x32xf32>
    %c1 = arith.constant 1 : index
    %c0_3 = arith.constant 0 : index
    %2 = vector.load %arg2[%c1, %c0_3] : memref<8x32xf32, #tpu.memory_space<vmem>>, vector<1x32xf32>
    %3 = vector.broadcast %0 : f32 to vector<1x32xf32>
    %4 = arith.mulf %3, %1 : vector<1x32xf32>
    %5 = arith.addf %4, %2 : vector<1x32xf32>
    %6 = math.tanh %5 : vector<1x32xf32>
    %c0_4 = arith.constant 0 : index
    %c0_5 = arith.constant 0 : index
    %7 = vector.load %arg3[%c0_4, %c0_5] : memref<32x195xf32, #tpu.memory_space<vmem>>, vector<32x195xf32>
    %cst = arith.constant dense<0.000000e+00> : vector<1x195xf32>
    %8 = tpu.matmul %6, %7, %cst {dimension_numbers = #tpu.dot_dimension_numbers<[1], [0], [0], [1], [0, 0, 1, 1], [], []>} : vector<1x32xf32>, vector<32x195xf32>, vector<1x195xf32> -> vector<1x195xf32>
    %c0_6 = arith.constant 0 : index
    %c0_7 = arith.constant 0 : index
    %9 = vector.load %arg4[%c0_6, %c0_7] : memref<1x195xf32, #tpu.memory_space<vmem>>, vector<1x195xf32>
    %10 = arith.addf %8, %9 : vector<1x195xf32>
    %c0_8 = arith.constant 0 : index
    %c0_9 = arith.constant 0 : index
    %11 = vector.load %arg1[%c0_8, %c0_9] : memref<8x32xf32, #tpu.memory_space<vmem>>, vector<8x32xf32>
    %12 = vector.extract_strided_slice %10 {offsets = [0, 0], sizes = [1, 32], strides = [1, 1]} : vector<1x195xf32> to vector<1x32xf32>
    %13 = vector.extract_strided_slice %10 {offsets = [0, 32], sizes = [1, 32], strides = [1, 1]} : vector<1x195xf32> to vector<1x32xf32>
    %14 = vector.extract_strided_slice %10 {offsets = [0, 64], sizes = [1, 1], strides = [1, 1]} : vector<1x195xf32> to vector<1x1xf32>
    %c2 = arith.constant 2 : index
    %c0_10 = arith.constant 0 : index
    %15 = vector.load %arg2[%c2, %c0_10] : memref<8x32xf32, #tpu.memory_space<vmem>>, vector<1x32xf32>
    %c0_11 = arith.constant 0 : index
    %c0_12 = arith.constant 0 : index
    %c0_13 = arith.constant 0 : index
    %16 = vector.load %arg5[%c0_11, %c0_12, %c0_13] : memref<3x32x32xf32, #tpu.memory_space<vmem>>, vector<1x32x32xf32>
    %17 = vector.shape_cast %16 : vector<1x32x32xf32> to vector<32x32xf32>
    %cst_14 = arith.constant dense<0.000000e+00> : vector<8x32xf32>
    %18 = tpu.matmul %11, %17, %cst_14 {dimension_numbers = #tpu.dot_dimension_numbers<[1], [0], [0], [1], [0, 0, 1, 1], [], []>} : vector<8x32xf32>, vector<32x32xf32>, vector<8x32xf32> -> vector<8x32xf32>
    %19 = vector.broadcast %13 : vector<1x32xf32> to vector<8x32xf32>
    %20 = arith.mulf %11, %19 : vector<8x32xf32>
    %cst_15 = arith.constant dense<0.000000e+00> : vector<8xf32>
    %21 = vector.multi_reduction <add>, %20, %cst_15 [1] : vector<8x32xf32> to vector<8xf32>
    %22 = vector.shape_cast %21 : vector<8xf32> to vector<8x1xf32>
    %23 = vector.broadcast %15 : vector<1x32xf32> to vector<8x32xf32>
    %24 = arith.addf %18, %23 : vector<8x32xf32>
    %25 = vector.broadcast %14 : vector<1x1xf32> to vector<8x1xf32>
    %26 = arith.mulf %25, %22 : vector<8x1xf32>
    %27 = vector.broadcast %26 : vector<8x1xf32> to vector<8x32xf32>
    %28 = vector.broadcast %12 : vector<1x32xf32> to vector<8x32xf32>
    %29 = arith.mulf %27, %28 : vector<8x32xf32>
    %30 = arith.addf %24, %29 : vector<8x32xf32>
    %31 = math.tanh %30 : vector<8x32xf32>
    %32 = vector.extract_strided_slice %10 {offsets = [0, 65], sizes = [1, 32], strides = [1, 1]} : vector<1x195xf32> to vector<1x32xf32>
    %33 = vector.extract_strided_slice %10 {offsets = [0, 97], sizes = [1, 32], strides = [1, 1]} : vector<1x195xf32> to vector<1x32xf32>
    %34 = vector.extract_strided_slice %10 {offsets = [0, 129], sizes = [1, 1], strides = [1, 1]} : vector<1x195xf32> to vector<1x1xf32>
    %c3 = arith.constant 3 : index
    %c0_16 = arith.constant 0 : index
    %35 = vector.load %arg2[%c3, %c0_16] : memref<8x32xf32, #tpu.memory_space<vmem>>, vector<1x32xf32>
    %c1_17 = arith.constant 1 : index
    %c0_18 = arith.constant 0 : index
    %c0_19 = arith.constant 0 : index
    %36 = vector.load %arg5[%c1_17, %c0_18, %c0_19] : memref<3x32x32xf32, #tpu.memory_space<vmem>>, vector<1x32x32xf32>
    %37 = vector.shape_cast %36 : vector<1x32x32xf32> to vector<32x32xf32>
    %cst_20 = arith.constant dense<0.000000e+00> : vector<8x32xf32>
    %38 = tpu.matmul %31, %37, %cst_20 {dimension_numbers = #tpu.dot_dimension_numbers<[1], [0], [0], [1], [0, 0, 1, 1], [], []>} : vector<8x32xf32>, vector<32x32xf32>, vector<8x32xf32> -> vector<8x32xf32>
    %39 = vector.broadcast %33 : vector<1x32xf32> to vector<8x32xf32>
    %40 = arith.mulf %31, %39 : vector<8x32xf32>
    %cst_21 = arith.constant dense<0.000000e+00> : vector<8xf32>
    %41 = vector.multi_reduction <add>, %40, %cst_21 [1] : vector<8x32xf32> to vector<8xf32>
    %42 = vector.shape_cast %41 : vector<8xf32> to vector<8x1xf32>
    %43 = vector.broadcast %35 : vector<1x32xf32> to vector<8x32xf32>
    %44 = arith.addf %38, %43 : vector<8x32xf32>
    %45 = vector.broadcast %34 : vector<1x1xf32> to vector<8x1xf32>
    %46 = arith.mulf %45, %42 : vector<8x1xf32>
    %47 = vector.broadcast %46 : vector<8x1xf32> to vector<8x32xf32>
    %48 = vector.broadcast %32 : vector<1x32xf32> to vector<8x32xf32>
    %49 = arith.mulf %47, %48 : vector<8x32xf32>
    %50 = arith.addf %44, %49 : vector<8x32xf32>
    %51 = math.tanh %50 : vector<8x32xf32>
    %52 = vector.extract_strided_slice %10 {offsets = [0, 130], sizes = [1, 32], strides = [1, 1]} : vector<1x195xf32> to vector<1x32xf32>
    %53 = vector.extract_strided_slice %10 {offsets = [0, 162], sizes = [1, 32], strides = [1, 1]} : vector<1x195xf32> to vector<1x32xf32>
    %54 = vector.extract_strided_slice %10 {offsets = [0, 194], sizes = [1, 1], strides = [1, 1]} : vector<1x195xf32> to vector<1x1xf32>
    %c4 = arith.constant 4 : index
    %c0_22 = arith.constant 0 : index
    %55 = vector.load %arg2[%c4, %c0_22] : memref<8x32xf32, #tpu.memory_space<vmem>>, vector<1x32xf32>
    %c2_23 = arith.constant 2 : index
    %c0_24 = arith.constant 0 : index
    %c0_25 = arith.constant 0 : index
    %56 = vector.load %arg5[%c2_23, %c0_24, %c0_25] : memref<3x32x32xf32, #tpu.memory_space<vmem>>, vector<1x32x32xf32>
    %57 = vector.shape_cast %56 : vector<1x32x32xf32> to vector<32x32xf32>
    %cst_26 = arith.constant dense<0.000000e+00> : vector<8x32xf32>
    %58 = tpu.matmul %51, %57, %cst_26 {dimension_numbers = #tpu.dot_dimension_numbers<[1], [0], [0], [1], [0, 0, 1, 1], [], []>} : vector<8x32xf32>, vector<32x32xf32>, vector<8x32xf32> -> vector<8x32xf32>
    %59 = vector.broadcast %53 : vector<1x32xf32> to vector<8x32xf32>
    %60 = arith.mulf %51, %59 : vector<8x32xf32>
    %cst_27 = arith.constant dense<0.000000e+00> : vector<8xf32>
    %61 = vector.multi_reduction <add>, %60, %cst_27 [1] : vector<8x32xf32> to vector<8xf32>
    %62 = vector.shape_cast %61 : vector<8xf32> to vector<8x1xf32>
    %63 = vector.broadcast %55 : vector<1x32xf32> to vector<8x32xf32>
    %64 = arith.addf %58, %63 : vector<8x32xf32>
    %65 = vector.broadcast %54 : vector<1x1xf32> to vector<8x1xf32>
    %66 = arith.mulf %65, %62 : vector<8x1xf32>
    %67 = vector.broadcast %66 : vector<8x1xf32> to vector<8x32xf32>
    %68 = vector.broadcast %52 : vector<1x32xf32> to vector<8x32xf32>
    %69 = arith.mulf %67, %68 : vector<8x32xf32>
    %70 = arith.addf %64, %69 : vector<8x32xf32>
    %c0_28 = arith.constant 0 : index
    %c0_29 = arith.constant 0 : index
    %71 = vector.load %arg6[%c0_28, %c0_29] : memref<8x32xf32, #tpu.memory_space<vmem>>, vector<8x32xf32>
    tpu.vector_store %arg6[%c0_28, %c0_29], %70 {strides = array<i32>} : memref<8x32xf32, #tpu.memory_space<vmem>>, vector<8x32xf32>,
    return
  }
}

</mosaic_0001>

<llo_original>
// kernel: tpu_custom_call.1
$region0: #{tpu_custom_call.1}
  #allocation0 [shape = 'u32[]', space=smem, size = 0x4, offset = 0x4, fixed_abs, tag = 'smem constant byte address 0x4 - core index']
  #allocation1 [shape = 'u32[144,128]{1,0:T(1,128)}', space=vmem, size = 0x12000, scoped, tag = 'internal scratch']
  #allocation2 [shape = 'f32[1,1]{1,0:T(1,128)S(6)}', space=smem, size = 0x200, scoped, tag = 'scoped memory for tpu_custom_call.1']
  %s0 = inlined_call_operand.<no memory space> [shape: f32[1,1], index: 0, kind: input, shape index: {}]
  %s1 = inlined_call_operand.hbm [shape: f32[8,32], index: 1, kind: input, shape index: {}]
  %s2 = inlined_call_operand.hbm [shape: f32[8,32], index: 2, kind: input, shape index: {}]
  %s3 = inlined_call_operand.hbm [shape: f32[32,195], index: 3, kind: input, shape index: {}]
  %s4 = inlined_call_operand.vmem [shape: f32[1,195], index: 4, kind: input, shape index: {}]
  %s5 = inlined_call_operand.hbm [shape: f32[3,32,32], index: 5, kind: input, shape index: {}]
  %s6 = inlined_call_operand.hbm [shape: f32[8,32], index: 6, kind: output, shape index: {}]
  %s7 = sld [smem:[#allocation0]]
  $region50: #{tpu_custom_call.1} parent=0
    _
  %s9 = ssub.s32 1, %s7
  %s10 = scalar_select 0, %s9, %s7
  %11 = sst [smem:[#allocation2]] %s0
  $region1: #{tpu_custom_call.1} parent=0
    #allocation3 [shape = 'u8[4096]{0}', space=vmem, size = 0x1000, scoped, tag = 'input window, operand 1, single buffered']
    #allocation4 [shape = 's32[1]{0}', space=sflag, size = 0x4, scoped, tag = 'scoped memory for tpu_custom_call.1']
    #allocation5 [shape = 's32[1]{0}', space=sflag, size = 0x4, scoped, tag = 'scoped memory for tpu_custom_call.1']
    #allocation6 [shape = 'u8[4096]{0}', space=vmem, size = 0x1000, scoped, tag = 'input window, operand 2, single buffered']
    #allocation7 [shape = 's32[1]{0}', space=sflag, size = 0x4, scoped, tag = 'scoped memory for tpu_custom_call.1']
    #allocation8 [shape = 'u8[32768]{0}', space=vmem, size = 0x8000, scoped, tag = 'input window, operand 3, single buffered']
    #allocation9 [shape = 'u8[49152]{0}', space=vmem, size = 0xc000, scoped, tag = 'input window, operand 5, single buffered']
    #allocation10 [shape = 's32[1]{0}', space=sflag, size = 0x4, scoped, tag = 'scoped memory for tpu_custom_call.1']
    #allocation11 [shape = 'u8[4096]{0}', space=vmem, size = 0x1000, scoped, tag = 'output window, operand 0, single buffered']
    %12 = vsyncpa [#allocation4], 0
    %13 = vsyncpa [#allocation7], 0
    %14 = vsyncpa [#allocation10], 0
    %15 = vsyncpa [#allocation5], 0
    // Predicated region
    $region2: #{tpu_custom_call.1} parent=1 // pred_check
      _
    $region3: #{tpu_custom_call.1} parent=1 // pred_check_branch
      %17 = sbr.rel (0) target = $region5
    $region4: #{tpu_custom_call.1} parent=1 // pred_region
      _
    $region5: #{tpu_custom_call.1} parent=1 // pred_fallthru
      _
    // Predicated region
    $region6: #{tpu_custom_call.1} parent=1 // pred_check
      _
    $region7: #{tpu_custom_call.1} parent=1 // pred_check_branch
      %19 = sbr.rel (0) target = $region9
    $region8: #{tpu_custom_call.1} parent=1 // pred_region
      %s21 = ssub.s32 128, 128
      %22 = vsyncadd [#allocation4], %s21
      %s24 = sshll.u32 [#allocation3], 4
      %s25 = int_to_ptr.vmem [resolvable:$true] %s24
      %27 = dma.hbm_to_vmem [thread:$0]  %s1, 128, %s25, [#allocation4]
    $region9: #{tpu_custom_call.1} parent=1 // pred_fallthru
      _
    // Predicated region
    $region10: #{tpu_custom_call.1} parent=1 // pred_check
      _
    $region11: #{tpu_custom_call.1} parent=1 // pred_check_branch
      %29 = sbr.rel (0) target = $region13
    $region12: #{tpu_custom_call.1} parent=1 // pred_region
      %s31 = ssub.s32 128, 128
      %32 = vsyncadd [#allocation7], %s31
      %s34 = sshll.u32 [#allocation6], 4
      %s35 = int_to_ptr.vmem [resolvable:$true] %s34
      %37 = dma.hbm_to_vmem [thread:$0]  %s2, 128, %s35, [#allocation7]
    $region13: #{tpu_custom_call.1} parent=1 // pred_fallthru
      _
    // Predicated region
    $region14: #{tpu_custom_call.1} parent=1 // pred_check
      _
    $region15: #{tpu_custom_call.1} parent=1 // pred_check_branch
      %39 = sbr.rel (0) target = $region17
    $region16: #{tpu_custom_call.1} parent=1 // pred_region
      %s41 = ssub.s32 1024, 1024
      %42 = vsyncadd [#allocation7], %s41
      %s43 = sshll.u32 [#allocation8], 4
      %s44 = int_to_ptr.vmem [resolvable:$true] %s43
      %49 = dma.hbm_to_vmem [thread:$0]  %s3, 1024, %s44, [#allocation7], 256, 256, 16
    $region17: #{tpu_custom_call.1} parent=1 // pred_fallthru
      _
    // Predicated region
    $region18: #{tpu_custom_call.1} parent=1 // pred_check
      _
    $region19: #{tpu_custom_call.1} parent=1 // pred_check_branch
      %51 = sbr.rel (0) target = $region21
    $region20: #{tpu_custom_call.1} parent=1 // pred_region
      _
    $region21: #{tpu_custom_call.1} parent=1 // pred_fallthru
      _
    // Predicated region
    $region22: #{tpu_custom_call.1} parent=1 // pred_check
      _
    $region23: #{tpu_custom_call.1} parent=1 // pred_check_branch
      %53 = sbr.rel (0) target = $region25
    $region24: #{tpu_custom_call.1} parent=1 // pred_region
      %s55 = ssub.s32 1536, 1536
      %56 = vsyncadd [#allocation10], %s55
      %s57 = sshll.u32 [#allocation9], 4
      %s58 = int_to_ptr.vmem [resolvable:$true] %s57
      %63 = dma.hbm_to_vmem [thread:$0]  %s5, 1536, %s58, [#allocation10], 128, 128, 8
    $region25: #{tpu_custom_call.1} parent=1 // pred_fallthru
      _
    // Predicated region
    $region26: #{tpu_custom_call.1} parent=1 // pred_check
      _
    $region27: #{tpu_custom_call.1} parent=1 // pred_check_branch
      %65 = sbr.rel (0) target = $region29
    $region28: #{tpu_custom_call.1} parent=1 // pred_region
      %66 = dma.done [#allocation4], 128
    $region29: #{tpu_custom_call.1} parent=1 // pred_fallthru
      _
    // Predicated region
    $region30: #{tpu_custom_call.1} parent=1 // pred_check
      _
    $region31: #{tpu_custom_call.1} parent=1 // pred_check_branch
      %68 = sbr.rel (0) target = $region33
    $region32: #{tpu_custom_call.1} parent=1 // pred_region
      %69 = dma.done [#allocation7], 128
    $region33: #{tpu_custom_call.1} parent=1 // pred_fallthru
      _
    // Predicated region
    $region34: #{tpu_custom_call.1} parent=1 // pred_check
      _
    $region35: #{tpu_custom_call.1} parent=1 // pred_check_branch
      %71 = sbr.rel (0) target = $region37
    $region36: #{tpu_custom_call.1} parent=1 // pred_region
      %72 = dma.done [#allocation7], 1024
    $region37: #{tpu_custom_call.1} parent=1 // pred_fallthru
      _
    // Predicated region
    $region38: #{tpu_custom_call.1} parent=1 // pred_check
      _
    $region39: #{tpu_custom_call.1} parent=1 // pred_check_branch
      %74 = sbr.rel (0) target = $region41
    $region40: #{tpu_custom_call.1} parent=1 // pred_region
      %75 = dma.done [#allocation10], 1536
    $region41: #{tpu_custom_call.1} parent=1 // pred_fallthru
      _
    %s76 = sld [smem:[#allocation2]]
    %v77 = vld [vmem:[#allocation6] sm:$0x1]
    %v78 = vld [vmem:[#allocation6 + $0x1] sm:$0x1]
    %v79 = vstv %s76
    %v80 = vmul.f32 %v79, %v77
    %v81 = vadd.f32 %v80, %v78
    %v82 = vtanh.pop %v81
    %v83 = vld [vmem:[#allocation8] sm:$0xff]
    %v84 = vld [vmem:[#allocation8 + $0x8] sm:$0xff]
    %v85 = vld [vmem:[#allocation8 + $0x10] sm:$0xff]
    %v86 = vld [vmem:[#allocation8 + $0x18] sm:$0xff]
    %v87 = vld [vmem:[#allocation8 + $0x20] sm:$0xff]
    %v88 = vld [vmem:[#allocation8 + $0x28] sm:$0xff]
    %v89 = vld [vmem:[#allocation8 + $0x30] sm:$0xff]
    %v90 = vld [vmem:[#allocation8 + $0x38] sm:$0xff]
    %v91 = vld [vmem:[%s4] sm:$0x3]
    %v93 = vlaneseq
    %v94 = vshrl.u32 %v93, 7
    %v95 = vsub.s32 0, %v94
    %v96 = vrot.slane %v91, %v95
    %v97 = vlaneseq
    %v98 = vshrl.u32 %v97, 7
    %v99 = vsub.s32 1, %v98
    %v100 = vrot.slane %v91, %v99
    %vm103 = vcmask 261120
    %v105 = vsel %vm103, %v82, 0
    %107 = vmatprep.subr.mxu0 %v84
    %108 = vmatpush1.msra.mxu0 %v83
    %109 = vmatprep.subr.mxu0 %v86
    %110 = vmatpush1.msra.mxu0 %v85
    %111 = vmatprep.subr.mxu0 %v88
    %112 = vmatpush1.msra.mxu0 %v87
    %113 = vmatprep.subr.mxu0 %v90
    %114 = vmatpush1.msra.mxu0 %v89
    %115 = vmatprep.subr.mxu0 0.0
    %116 = vmatpush1.msra.mxu0 0.0
    %117 = vmatprep.subr.mxu0 0.0
    %118 = vmatpush1.msra.mxu0 0.0
    %119 = vmatprep.subr.mxu0 0.0
    %120 = vmatpush1.msra.mxu0 0.0
    %121 = vmatprep.subr.mxu0 0.0
    %122 = vmatpush1.msra.mxu0 0.0
    %123 = vmatprep.subr.mxu0 0.0
    %124 = vmatpush1.msra.mxu0 0.0
    %125 = vmatprep.subr.mxu0 0.0
    %126 = vmatpush1.msra.mxu0 0.0
    %127 = vmatprep.subr.mxu0 0.0
    %128 = vmatpush1.msra.mxu0 0.0
    %129 = vmatprep.subr.mxu0 0.0
    %130 = vmatpush1.msra.mxu0 0.0
    %131 = vmatprep.subr.mxu0 0.0
    %132 = vmatpush1.msra.mxu0 0.0
    %133 = vmatprep.subr.mxu0 0.0
    %134 = vmatpush1.msra.mxu0 0.0
    %135 = vmatprep.subr.mxu0 0.0
    %136 = vmatpush1.msra.mxu0 0.0
    %137 = vmatprep.subr.mxu0 0.0
    %138 = vmatpush1.msra.mxu0 0.0
    %139 = vmatprep.subr.mxu0 0.0
    %140 = vmatpush1.msra.mxu0 0.0
    %141 = vmatprep.subr.mxu0 0.0
    %142 = vmatpush1.msra.mxu0 0.0
    %143 = vmatprep.subr.mxu0 0.0
    %144 = vmatpush1.msra.mxu0 0.0
    %145 = vmatprep.subr.mxu0 0.0
    %146 = vmatpush1.msra.mxu0 0.0
    %147 = vmatprep.subr.mxu0 0.0
    %148 = vmatpush1.msra.mxu0 0.0
    %149 = vmatprep.subr.mxu0 0.0
    %150 = vmatpush1.msra.mxu0 0.0
    %151 = vmatprep.subr.mxu0 0.0
    %152 = vmatpush1.msra.mxu0 0.0
    %153 = vmatprep.subr.mxu0 0.0
    %154 = vmatpush1.msra.mxu0 0.0
    %155 = vmatprep.subr.mxu0 0.0
    %156 = vmatpush1.msra.mxu0 0.0
    %157 = vmatprep.subr.mxu0 0.0
    %158 = vmatpush1.msra.mxu0 0.0
    %159 = vmatprep.subr.mxu0 0.0
    %160 = vmatpush1.msra.mxu0 0.0
    %161 = vmatprep.subr.mxu0 0.0
    %162 = vmatpush1.msra.mxu0 0.0
    %163 = vmatprep.subr.mxu0 0.0
    %164 = vmatpush1.msra.mxu0 0.0
    %165 = vmatprep.subr.mxu0 0.0
    %166 = vmatpush1.msra.mxu0 0.0
    %167 = vmatprep.subr.mxu0 0.0
    %168 = vmatpush1.msra.mxu0 0.0
    %169 = vmatprep.subr.mxu0 0.0
    %170 = vmatpush1.msra.mxu0 0.0
    %171 = vmatprep.mubr.f32.mxu0 0.0
    %172 = vmatmul.mubr.f32.gmra.mrb[0].mxu0 %v105
    %v173 = vpop.f32.mrb[0].mxu0
    %v174 = vadd.f32 %v96, %v173
    %v175 = vpop.f32.mrb[0].mxu0
    %v176 = vadd.f32 %v100, %v175
    %177 = vdwg.mxu0
    %v178 = vld [vmem:[#allocation3] sm:$0xff]
    %v179 = vld [vmem:[#allocation6 + $0x2] sm:$0x1]
    %v180 = vld [vmem:[#allocation9] sm:$0xff]
    %v181 = vld [vmem:[#allocation9 + $0x8] sm:$0xff]
    %v182 = vld [vmem:[#allocation9 + $0x10] sm:$0xff]
    %v183 = vld [vmem:[#allocation9 + $0x18] sm:$0xff]
    %v184 = vlaneseq
    %v185 = vshrl.u32 %v184, 7
    %v186 = vsub.s32 0, %v185
    %v187 = vrot.slane %v174, %v186
    %189 = vrot.lane.b32.xlu0 %v187, 96
    %v190 = vpop.permute.xlu0 %189
    %v192 = vmul.f32 %v178, %v190
    %v193 = vsel %vm103, %v192, 0.0
    %194 = vadd.xlane.f32.xlu0 %v193
    %v195 = vpop.xlane.xlu0 %194
    %v196 = vlaneseq
    %v197 = vshrl.u32 %v196, 7
    %v198 = vsub.s32 0, %v197
    %v199 = vrot.slane %v179, %v198
    %v201 = vsel %vm103, %v178, 0
    %203 = vmatprep.subr.mxu0 0.0
    %204 = vmatpush1.msra.mxu0 %v180
    %205 = vmatprep.subr.mxu0 0.0
    %206 = vmatpush1.msra.mxu0 %v181
    %207 = vmatprep.subr.mxu0 0.0
    %208 = vmatpush1.msra.mxu0 %v182
    %209 = vmatprep.subr.mxu0 0.0
    %210 = vmatpush1.msra.mxu0 %v183
    %211 = vmatprep.subr.mxu0 0.0
    %212 = vmatpush1.msra.mxu0 0.0
    %213 = vmatprep.subr.mxu0 0.0
    %214 = vmatpush1.msra.mxu0 0.0
    %215 = vmatprep.subr.mxu0 0.0
    %216 = vmatpush1.msra.mxu0 0.0
    %217 = vmatprep.subr.mxu0 0.0
    %218 = vmatpush1.msra.mxu0 0.0
    %219 = vmatprep.subr.mxu0 0.0
    %220 = vmatpush1.msra.mxu0 0.0
    %221 = vmatprep.subr.mxu0 0.0
    %222 = vmatpush1.msra.mxu0 0.0
    %223 = vmatprep.subr.mxu0 0.0
    %224 = vmatpush1.msra.mxu0 0.0
    %225 = vmatprep.subr.mxu0 0.0
    %226 = vmatpush1.msra.mxu0 0.0
    %227 = vmatprep.subr.mxu0 0.0
    %228 = vmatpush1.msra.mxu0 0.0
    %229 = vmatprep.subr.mxu0 0.0
    %230 = vmatpush1.msra.mxu0 0.0
    %231 = vmatprep.subr.mxu0 0.0
    %232 = vmatpush1.msra.mxu0 0.0
    %233 = vmatprep.subr.mxu0 0.0
    %234 = vmatpush1.msra.mxu0 0.0
    %235 = vmatprep.subr.mxu0 0.0
    %236 = vmatpush1.msra.mxu0 0.0
    %237 = vmatprep.subr.mxu0 0.0
    %238 = vmatpush1.msra.mxu0 0.0
    %239 = vmatprep.subr.mxu0 0.0
    %240 = vmatpush1.msra.mxu0 0.0
    %241 = vmatprep.subr.mxu0 0.0
    %242 = vmatpush1.msra.mxu0 0.0
    %243 = vmatprep.subr.mxu0 0.0
    %244 = vmatpush1.msra.mxu0 0.0
    %245 = vmatprep.subr.mxu0 0.0
    %246 = vmatpush1.msra.mxu0 0.0
    %247 = vmatprep.subr.mxu0 0.0
    %248 = vmatpush1.msra.mxu0 0.0
    %249 = vmatprep.subr.mxu0 0.0
    %250 = vmatpush1.msra.mxu0 0.0
    %251 = vmatprep.subr.mxu0 0.0
    %252 = vmatpush1.msra.mxu0 0.0
    %253 = vmatprep.subr.mxu0 0.0
    %254 = vmatpush1.msra.mxu0 0.0
    %255 = vmatprep.subr.mxu0 0.0
    %256 = vmatpush1.msra.mxu0 0.0
    %257 = vmatprep.subr.mxu0 0.0
    %258 = vmatpush1.msra.mxu0 0.0
    %259 = vmatprep.subr.mxu0 0.0
    %260 = vmatpush1.msra.mxu0 0.0
    %261 = vmatprep.subr.mxu0 0.0
    %262 = vmatpush1.msra.mxu0 0.0
    %263 = vmatprep.subr.mxu0 0.0
    %264 = vmatpush1.msra.mxu0 0.0
    %265 = vmatprep.subr.mxu0 0.0
    %266 = vmatpush1.msra.mxu0 0.0
    %267 = vmatprep.mubr.f32.mxu0 0.0
    %268 = vmatmul.mubr.f32.gmra.mrb[0].mxu0 %v201
    %v269 = vpop.f32.mrb[0].mxu0
    %v270 = vadd.f32 %v199, %v269
    %v271 = vpop.f32.mrb[0].mxu0
    %272 = vdwg.mxu0
    %v273 = vmul.f32 %v187, %v195
    %275 = vset.pattern.permute.xlu0 64
    %276 = vperm.xlu0 %275, %v273
    %v277 = vpop.permute.xlu0 %276
    %v279 = vmul.f32 %v277, %v187
    %v280 = vadd.f32 %v270, %v279
    %v281 = vtanh.pop %v280
    %v282 = vld [vmem:[#allocation6 + $0x3] sm:$0x1]
    %s283 = scalar_lea.vmem [#allocation9], 32
    %v284 = vld [vmem:[%s283] sm:$0xff]
    %v285 = vld [vmem:[%s283 + $0x8] sm:$0xff]
    %v286 = vld [vmem:[%s283 + $0x10] sm:$0xff]
    %v287 = vld [vmem:[%s283 + $0x18] sm:$0xff]
    %v288 = vlaneseq
    %v289 = vshrl.u32 %v288, 7
    %v290 = vsub.s32 0, %v289
    %v291 = vrot.slane %v176, %v290
    %293 = vrot.lane.b32.xlu0 %v187, 31
    %v294 = vpop.permute.xlu0 %293
    %295 = vrot.lane.b32.xlu0 %v291, 31
    %v296 = vpop.permute.xlu0 %295
    %vm297 = vcmask 252928
    %v298 = vsel %vm297, %v294, %v296
    %v300 = vmul.f32 %v281, %v298
    %v301 = vsel %vm103, %v300, 0.0
    %302 = vadd.xlane.f32.xlu0 %v301
    %v303 = vpop.xlane.xlu0 %302
    %v304 = vlaneseq
    %v305 = vshrl.u32 %v304, 7
    %v306 = vsub.s32 0, %v305
    %v307 = vrot.slane %v282, %v306
    %v309 = vsel %vm103, %v281, 0
    %311 = vmatprep.subr.mxu0 0.0
    %312 = vmatpush1.msra.mxu0 %v284
    %313 = vmatprep.subr.mxu0 0.0
    %314 = vmatpush1.msra.mxu0 %v285
    %315 = vmatprep.subr.mxu0 0.0
    %316 = vmatpush1.msra.mxu0 %v286
    %317 = vmatprep.subr.mxu0 0.0
    %318 = vmatpush1.msra.mxu0 %v287
    %319 = vmatprep.subr.mxu0 0.0
    %320 = vmatpush1.msra.mxu0 0.0
    %321 = vmatprep.subr.mxu0 0.0
    %322 = vmatpush1.msra.mxu0 0.0
    %323 = vmatprep.subr.mxu0 0.0
    %324 = vmatpush1.msra.mxu0 0.0
    %325 = vmatprep.subr.mxu0 0.0
    %326 = vmatpush1.msra.mxu0 0.0
    %327 = vmatprep.subr.mxu0 0.0
    %328 = vmatpush1.msra.mxu0 0.0
    %329 = vmatprep.subr.mxu0 0.0
    %330 = vmatpush1.msra.mxu0 0.0
    %331 = vmatprep.subr.mxu0 0.0
    %332 = vmatpush1.msra.mxu0 0.0
    %333 = vmatprep.subr.mxu0 0.0
    %334 = vmatpush1.msra.mxu0 0.0
    %335 = vmatprep.subr.mxu0 0.0
    %336 = vmatpush1.msra.mxu0 0.0
    %337 = vmatprep.subr.mxu0 0.0
    %338 = vmatpush1.msra.mxu0 0.0
    %339 = vmatprep.subr.mxu0 0.0
    %340 = vmatpush1.msra.mxu0 0.0
    %341 = vmatprep.subr.mxu0 0.0
    %342 = vmatpush1.msra.mxu0 0.0
    %343 = vmatprep.subr.mxu0 0.0
    %344 = vmatpush1.msra.mxu0 0.0
    %345 = vmatprep.subr.mxu0 0.0
    %346 = vmatpush1.msra.mxu0 0.0
    %347 = vmatprep.subr.mxu0 0.0
    %348 = vmatpush1.msra.mxu0 0.0
    %349 = vmatprep.subr.mxu0 0.0
    %350 = vmatpush1.msra.mxu0 0.0
    %351 = vmatprep.subr.mxu0 0.0
    %352 = vmatpush1.msra.mxu0 0.0
    %353 = vmatprep.subr.mxu0 0.0
    %354 = vmatpush1.msra.mxu0 0.0
    %355 = vmatprep.subr.mxu0 0.0
    %356 = vmatpush1.msra.mxu0 0.0
    %357 = vmatprep.subr.mxu0 0.0
    %358 = vmatpush1.msra.mxu0 0.0
    %359 = vmatprep.subr.mxu0 0.0
    %360 = vmatpush1.msra.mxu0 0.0
    %361 = vmatprep.subr.mxu0 0.0
    %362 = vmatpush1.msra.mxu0 0.0
    %363 = vmatprep.subr.mxu0 0.0
    %364 = vmatpush1.msra.mxu0 0.0
    %365 = vmatprep.subr.mxu0 0.0
    %366 = vmatpush1.msra.mxu0 0.0
    %367 = vmatprep.subr.mxu0 0.0
    %368 = vmatpush1.msra.mxu0 0.0
    %369 = vmatprep.subr.mxu0 0.0
    %370 = vmatpush1.msra.mxu0 0.0
    %371 = vmatprep.subr.mxu0 0.0
    %372 = vmatpush1.msra.mxu0 0.0
    %373 = vmatprep.subr.mxu0 0.0
    %374 = vmatpush1.msra.mxu0 0.0
    %375 = vmatprep.mubr.f32.mxu0 0.0
    %376 = vmatmul.mubr.f32.gmra.mrb[0].mxu0 %v309
    %v377 = vpop.f32.mrb[0].mxu0
    %v378 = vadd.f32 %v307, %v377
    %v379 = vpop.f32.mrb[0].mxu0
    %380 = vdwg.mxu0
    %v381 = vmul.f32 %v291, %v303
    %383 = vset.pattern.permute.xlu0 1
    %384 = vperm.xlu0 %383, %v381
    %v385 = vpop.permute.xlu0 %384
    %v387 = vmul.f32 %v385, %v187
    %389 = vrot.lane.b32.xlu0 %v387, 63
    %v390 = vpop.permute.xlu0 %389
    %v392 = vadd.f32 %v378, %v390
    %v393 = vtanh.pop %v392
    %v394 = vld [vmem:[#allocation6 + $0x4] sm:$0x1]
    %s395 = scalar_lea.vmem [#allocation9], 64
    %v396 = vld [vmem:[%s395] sm:$0xff]
    %v397 = vld [vmem:[%s395 + $0x8] sm:$0xff]
    %v398 = vld [vmem:[%s395 + $0x10] sm:$0xff]
    %v399 = vld [vmem:[%s395 + $0x18] sm:$0xff]
    %400 = vrot.lane.b32.xlu0 %v291, 94
    %v401 = vpop.permute.xlu0 %400
    %v403 = vmul.f32 %v393, %v401
    %v404 = vsel %vm103, %v403, 0.0
    %405 = vadd.xlane.f32.xlu0 %v404
    %v406 = vpop.xlane.xlu0 %405
    %v407 = vlaneseq
    %v408 = vshrl.u32 %v407, 7
    %v409 = vsub.s32 0, %v408
    %v410 = vrot.slane %v394, %v409
    %v412 = vsel %vm103, %v393, 0
    %414 = vmatprep.subr.mxu0 0.0
    %415 = vmatpush1.msra.mxu0 %v396
    %416 = vmatprep.subr.mxu0 0.0
    %417 = vmatpush1.msra.mxu0 %v397
    %418 = vmatprep.subr.mxu0 0.0
    %419 = vmatpush1.msra.mxu0 %v398
    %420 = vmatprep.subr.mxu0 0.0
    %421 = vmatpush1.msra.mxu0 %v399
    %422 = vmatprep.subr.mxu0 0.0
    %423 = vmatpush1.msra.mxu0 0.0
    %424 = vmatprep.subr.mxu0 0.0
    %425 = vmatpush1.msra.mxu0 0.0
    %426 = vmatprep.subr.mxu0 0.0
    %427 = vmatpush1.msra.mxu0 0.0
    %428 = vmatprep.subr.mxu0 0.0
    %429 = vmatpush1.msra.mxu0 0.0
    %430 = vmatprep.subr.mxu0 0.0
    %431 = vmatpush1.msra.mxu0 0.0
    %432 = vmatprep.subr.mxu0 0.0
    %433 = vmatpush1.msra.mxu0 0.0
    %434 = vmatprep.subr.mxu0 0.0
    %435 = vmatpush1.msra.mxu0 0.0
    %436 = vmatprep.subr.mxu0 0.0
    %437 = vmatpush1.msra.mxu0 0.0
    %438 = vmatprep.subr.mxu0 0.0
    %439 = vmatpush1.msra.mxu0 0.0
    %440 = vmatprep.subr.mxu0 0.0
    %441 = vmatpush1.msra.mxu0 0.0
    %442 = vmatprep.subr.mxu0 0.0
    %443 = vmatpush1.msra.mxu0 0.0
    %444 = vmatprep.subr.mxu0 0.0
    %445 = vmatpush1.msra.mxu0 0.0
    %446 = vmatprep.subr.mxu0 0.0
    %447 = vmatpush1.msra.mxu0 0.0
    %448 = vmatprep.subr.mxu0 0.0
    %449 = vmatpush1.msra.mxu0 0.0
    %450 = vmatprep.subr.mxu0 0.0
    %451 = vmatpush1.msra.mxu0 0.0
    %452 = vmatprep.subr.mxu0 0.0
    %453 = vmatpush1.msra.mxu0 0.0
    %454 = vmatprep.subr.mxu0 0.0
    %455 = vmatpush1.msra.mxu0 0.0
    %456 = vmatprep.subr.mxu0 0.0
    %457 = vmatpush1.msra.mxu0 0.0
    %458 = vmatprep.subr.mxu0 0.0
    %459 = vmatpush1.msra.mxu0 0.0
    %460 = vmatprep.subr.mxu0 0.0
    %461 = vmatpush1.msra.mxu0 0.0
    %462 = vmatprep.subr.mxu0 0.0
    %463 = vmatpush1.msra.mxu0 0.0
    %464 = vmatprep.subr.mxu0 0.0
    %465 = vmatpush1.msra.mxu0 0.0
    %466 = vmatprep.subr.mxu0 0.0
    %467 = vmatpush1.msra.mxu0 0.0
    %468 = vmatprep.subr.mxu0 0.0
    %469 = vmatpush1.msra.mxu0 0.0
    %470 = vmatprep.subr.mxu0 0.0
    %471 = vmatpush1.msra.mxu0 0.0
    %472 = vmatprep.subr.mxu0 0.0
    %473 = vmatpush1.msra.mxu0 0.0
    %474 = vmatprep.subr.mxu0 0.0
    %475 = vmatpush1.msra.mxu0 0.0
    %476 = vmatprep.subr.mxu0 0.0
    %477 = vmatpush1.msra.mxu0 0.0
    %478 = vmatprep.mubr.f32.mxu0 0.0
    %479 = vmatmul.mubr.f32.gmra.mrb[0].mxu0 %v412
    %v480 = vpop.f32.mrb[0].mxu0
    %v481 = vadd.f32 %v410, %v480
    %v482 = vpop.f32.mrb[0].mxu0
    %483 = vdwg.mxu0
    %v484 = vmul.f32 %v291, %v406
    %486 = vset.pattern.permute.xlu0 66
    %487 = vperm.xlu0 %486, %v484
    %v488 = vpop.permute.xlu0 %487
    %v490 = vmul.f32 %v488, %v291
    %492 = vrot.lane.b32.xlu0 %v490, 126
    %v493 = vpop.permute.xlu0 %492
    %v495 = vadd.f32 %v481, %v493
    %496 = vst.msk [vmem:[#allocation11] sm:$0xff] %vm103, %v495
    // Predicated region
    $region42: #{tpu_custom_call.1} parent=1 // pred_check
      _
    $region43: #{tpu_custom_call.1} parent=1 // pred_check_branch
      %498 = sbr.rel (0) target = $region45
    $region44: #{tpu_custom_call.1} parent=1 // pred_region
      %s500 = ssub.s32 128, 128
      %501 = vsyncadd [#allocation5], %s500
      %s503 = sshll.u32 [#allocation11], 4
      %s504 = int_to_ptr.vmem [resolvable:$true] %s503
      %506 = dma.vmem_to_hbm [thread:$0]  %s504, 128, %s6, [#allocation5]
    $region45: #{tpu_custom_call.1} parent=1 // pred_fallthru
      _
    // Predicated region
    $region46: #{tpu_custom_call.1} parent=1 // pred_check
      _
    $region47: #{tpu_custom_call.1} parent=1 // pred_check_branch
      %508 = sbr.rel (0) target = $region49
    $region48: #{tpu_custom_call.1} parent=1 // pred_region
      %509 = dma.done [#allocation5], 128
    $region49: #{tpu_custom_call.1} parent=1 // pred_fallthru
      _
    %510 = vsyncpa [#allocation4], 1
    %511 = vsyncpa [#allocation7], 1
    %512 = vsyncpa [#allocation10], 1
    %513 = vsyncpa [#allocation5], 1

</llo_original>
